<compile_context>
chip_gen: v7x
topology: tpu7x:2x2x1
jax: 0.10.0
libtpu: 0.0.40
codegen_flags: <defaults>
</compile_context>

<pallas_src>
import jax
import jax.numpy as jnp
from jax.experimental import pallas as pl
from jax.experimental.pallas import tpu as pltpu

hidden_size = 64
output_size = 2


def _round_up(n, m):
    return ((n + m - 1) // m) * m


def _mlp_kernel(x_ref, w1_ref, b1_ref, w2_ref, b2_ref, o_ref):
    # x_ref : (TR, P*D_in)      w1_ref: (P*D_in, P*H)   b1_ref: (1, P*H)
    # w2_ref: (P*H, P*D_out)    b2_ref: (1, P*D_out)    o_ref : (TR, P*D_out)
    h = jnp.dot(x_ref[...], w1_ref[...], preferred_element_type=jnp.float32)
    h = jnp.maximum(h + b1_ref[...], 0.0)           # bias + ReLU in f32 (VPU)
    y = jnp.dot(h, w2_ref[...], preferred_element_type=jnp.float32)
    o_ref[...] = (y + b2_ref[...]).astype(o_ref.dtype)


def _block_diag(w, p):
    """(K, N) -> (p*K, p*N): block-diagonal with p copies of w on the diagonal."""
    k, n = w.shape
    eye = jnp.eye(p, dtype=w.dtype)
    return jnp.einsum("pq,kn->pkqn", eye, w).reshape(p * k, p * n)


def ex_mlp_forward(x, w1, b1, w2, b2, *, block_rows=2048, pack=8):
    """x: (batch, seq, input_size) -> (batch, seq, output_size).

    block_rows: row-tile size in *packed* rows (each packed row = P logical rows).
    pack:       max row-packing factor; 8 fills the v6e/v7x MXU K dim (256),
                use 4 on v5e (4x128 MXU).
    """
    B, S, D_in = x.shape
    H = w1.shape[1]
    D_out = w2.shape[1]
    R = B * S

    # Largest pack factor <= `pack` that divides R, so the packing reshape is
    # a free row-major metadata op (no jnp.pad copy of x in HBM).
    P = 1
    for cand in (8, 4, 2):
        if cand <= pack and R % cand == 0:
            P = cand
            break

    Rp = R // P
    Kp, Hp, Op = P * D_in, P * H, P * D_out

    x_p = x.reshape(Rp, Kp)                        # free reshape, no copy
    w1_bd = _block_diag(w1, P)                     # (Kp, Hp)
    w2_bd = _block_diag(w2, P)                     # (Hp, Op)
    b1_bd = jnp.tile(b1.reshape(1, H), (1, P))     # (1, Hp)
    b2_bd = jnp.tile(b2.reshape(1, D_out), (1, P))  # (1, Op)

    # Row tile selection.  Ragged tails are handled by Pallas boundary masking
    # (partial last block), never by padding x in HBM.
    if Rp > block_rows:
        TR = _round_up(block_rows, 8)              # steady-state tiling
    elif Rp >= 16:
        # Fits in one tile, but split in two so the "parallel" row axis can be
        # sharded across v7x's two TensorCores (neutral on v5e/v6e).
        TR = _round_up(pl.cdiv(Rp, 2), 8)
    else:
        TR = Rp                                    # tiny input: one full block
    nsteps = pl.cdiv(Rp, TR)

    out_p = pl.pallas_call(
        _mlp_kernel,
        out_shape=jax.ShapeDtypeStruct((Rp, Op), x.dtype),
        grid_spec=pltpu.PrefetchScalarGridSpec(
            num_scalar_prefetch=0,
            grid=(nsteps,),
            in_specs=[
                pl.BlockSpec((TR, Kp), lambda i: (i, 0)),   # row-tiled packed x
                pl.BlockSpec((Kp, Hp), lambda i: (0, 0)),   # resident W1 (blockdiag)
                pl.BlockSpec((1, Hp), lambda i: (0, 0)),    # resident b1
                pl.BlockSpec((Hp, Op), lambda i: (0, 0)),   # resident W2 (blockdiag)
                pl.BlockSpec((1, Op), lambda i: (0, 0)),    # resident b2
            ],
            out_specs=pl.BlockSpec((TR, Op), lambda i: (i, 0)),
        ),
        compiler_params=pltpu.CompilerParams(
            # Packed rows are independent -> megacore-shard on v7x.
            dimension_semantics=("parallel",)),
    )(x_p, w1_bd, b1_bd, w2_bd, b2_bd)

    # Unpack: (Rp, P*D_out) -> (R, D_out) is another free row-major reshape.
    return out_p.reshape(B, S, D_out)


def init_params(key, input_size, hidden, output):
    """Deterministic xavier-normal weights, zero biases (matches MatMul init)."""
    k1, k2 = jax.random.split(key)
    std1 = (2.0 / (input_size + hidden)) ** 0.5
    std2 = (2.0 / (hidden + output)) ** 0.5
    w1 = std1 * jax.random.normal(k1, (input_size, hidden), dtype=jnp.float32)
    b1 = jnp.zeros((1, 1, hidden), dtype=jnp.float32)
    w2 = std2 * jax.random.normal(k2, (hidden, output), dtype=jnp.float32)
    b2 = jnp.zeros((1, 1, output), dtype=jnp.float32)
    return w1, b1, w2, b2


def _jax_ref(x, w1, b1, w2, b2):
    h = jnp.maximum(x @ w1 + b1, 0.0)
    return h @ w2 + b2


if __name__ == "__main__":
    key = jax.random.PRNGKey(0)
    kx, kx2, kx3, kp, kb1, kb2 = jax.random.split(key, 6)

    batch, seq, input_size = 2, 8, 32
    w1, b1, w2, b2 = init_params(kp, input_size, hidden_size, output_size)
    # Non-zero biases so the bias path is genuinely exercised (the module
    # itself initializes them to zero; these values are only for testing).
    b1 = 0.1 * jax.random.normal(kb1, b1.shape, dtype=jnp.float32)
    b2 = 0.1 * jax.random.normal(kb2, b2.shape, dtype=jnp.float32)

    # 1) Small shape, pack=8 (R=16), single full-extent tile.
    x = jax.random.normal(kx, (batch, seq, input_size), dtype=jnp.float32)
    y = ex_mlp_forward(x, w1, b1, w2, b2)
    jax.block_until_ready(y)
    y_ref = _jax_ref(x, w1, b1, w2, b2)
    assert y.shape == (batch, seq, output_size)
    assert jnp.allclose(y, y_ref, atol=1e-5, rtol=1e-5)

    # 2) Multi-tile + ragged (boundary-masked) last tile; pack falls back to 4
    #    since R=300 is not divisible by 8.
    xb = jax.random.normal(kx2, (3, 100, input_size), dtype=jnp.float32)
    yb = ex_mlp_forward(xb, w1, b1, w2, b2, block_rows=32)
    jax.block_until_ready(yb)
    yb_ref = _jax_ref(xb, w1, b1, w2, b2)
    assert yb.shape == (3, 100, output_size)
    assert jnp.allclose(yb, yb_ref, atol=1e-5, rtol=1e-5)

    # 3) Odd row count -> pack falls back to 1 (no packing), full-extent block.
    xc = jax.random.normal(kx3, (1, 7, input_size), dtype=jnp.float32)
    yc = ex_mlp_forward(xc, w1, b1, w2, b2)
    jax.block_until_ready(yc)
    yc_ref = _jax_ref(xc, w1, b1, w2, b2)
    assert yc.shape == (1, 7, output_size)
    assert jnp.allclose(yc, yc_ref, atol=1e-5, rtol=1e-5)

    print("KERNEL_OK")
</pallas_src>

<mosaic_0001>
module attributes {stable_mosaic.version = 11 : i64} {
  func.func @_mlp_kernel(%arg0: i32, %arg1: memref<2x256xf32, #tpu.memory_space<vmem>>, %arg2: memref<256x512xf32, #tpu.memory_space<vmem>>, %arg3: memref<1x512xf32, #tpu.memory_space<vmem>>, %arg4: memref<512x16xf32, #tpu.memory_space<vmem>>, %arg5: memref<1x16xf32, #tpu.memory_space<vmem>>, %arg6: memref<2x16xf32, #tpu.memory_space<vmem>>) attributes {dimension_semantics = [#tpu.dimension_semantics<parallel>], iteration_bounds = array<i64: 1>, scalar_prefetch = 0 : i64, scratch_operands = 0 : i64, tpu.core_type = #tpu.core_type<tc>, window_params = [{transform_indices = @transform_0, window_bounds = array<i64: 2, 256>}, {pipeline_mode = #tpu.pipeline_mode<synchronous>, transform_indices = @transform_1, window_bounds = array<i64: 256, 512>}, {pipeline_mode = #tpu.pipeline_mode<synchronous>, transform_indices = @transform_2, window_bounds = array<i64: 1, 512>}, {pipeline_mode = #tpu.pipeline_mode<synchronous>, transform_indices = @transform_3, window_bounds = array<i64: 512, 16>}, {pipeline_mode = #tpu.pipeline_mode<synchronous>, transform_indices = @transform_4, window_bounds = array<i64: 1, 16>}, {transform_indices = @transform_5, window_bounds = array<i64: 2, 16>}]} {
    %c0 = arith.constant 0 : index
    %c0_0 = arith.constant 0 : index
    %0 = vector.load %arg1[%c0, %c0_0] : memref<2x256xf32, #tpu.memory_space<vmem>>, vector<2x256xf32>
    %c0_1 = arith.constant 0 : index
    %c0_2 = arith.constant 0 : index
    %1 = vector.load %arg2[%c0_1, %c0_2] : memref<256x512xf32, #tpu.memory_space<vmem>>, vector<256x512xf32>
    %cst = arith.constant dense<0.000000e+00> : vector<2x512xf32>
    %2 = tpu.matmul %0, %1, %cst {dimension_numbers = #tpu.dot_dimension_numbers<[1], [0], [0], [1], [0, 0, 1, 1], [], []>} : vector<2x256xf32>, vector<256x512xf32>, vector<2x512xf32> -> vector<2x512xf32>
    %c0_3 = arith.constant 0 : index
    %c0_4 = arith.constant 0 : index
    %3 = vector.load %arg3[%c0_3, %c0_4] : memref<1x512xf32, #tpu.memory_space<vmem>>, vector<1x512xf32>
    %4 = vector.broadcast %3 : vector<1x512xf32> to vector<2x512xf32>
    %5 = arith.addf %2, %4 : vector<2x512xf32>
    %cst_5 = arith.constant 0.000000e+00 : f32
    %6 = vector.broadcast %cst_5 : f32 to vector<2x512xf32>
    %7 = arith.maximumf %5, %6 : vector<2x512xf32>
    %c0_6 = arith.constant 0 : index
    %c0_7 = arith.constant 0 : index
    %8 = vector.load %arg4[%c0_6, %c0_7] : memref<512x16xf32, #tpu.memory_space<vmem>>, vector<512x16xf32>
    %cst_8 = arith.constant dense<0.000000e+00> : vector<2x16xf32>
    %9 = tpu.matmul %7, %8, %cst_8 {dimension_numbers = #tpu.dot_dimension_numbers<[1], [0], [0], [1], [0, 0, 1, 1], [], []>} : vector<2x512xf32>, vector<512x16xf32>, vector<2x16xf32> -> vector<2x16xf32>
    %c0_9 = arith.constant 0 : index
    %c0_10 = arith.constant 0 : index
    %10 = vector.load %arg5[%c0_9, %c0_10] : memref<1x16xf32, #tpu.memory_space<vmem>>, vector<1x16xf32>
    %11 = vector.broadcast %10 : vector<1x16xf32> to vector<2x16xf32>
    %12 = arith.addf %9, %11 : vector<2x16xf32>
    %c0_11 = arith.constant 0 : index
    %c0_12 = arith.constant 0 : index
    %13 = vector.load %arg6[%c0_11, %c0_12] : memref<2x16xf32, #tpu.memory_space<vmem>>, vector<2x16xf32>
    tpu.vector_store %arg6[%c0_11, %c0_12], %12 {strides = array<i32>} : memref<2x16xf32, #tpu.memory_space<vmem>>, vector<2x16xf32>,
    return
  }
  func.func @transform_0(%arg0: i32) -> (i32, i32) {
    %c0_i32 = arith.constant 0 : i32
    %c0_i32_0 = arith.constant 0 : i32
    return %arg0, %c0_i32 : i32, i32
  }
  func.func @transform_1(%arg0: i32) -> (i32, i32) {
    %c0_i32 = arith.constant 0 : i32
    %c0_i32_0 = arith.constant 0 : i32
    %c0_i32_1 = arith.constant 0 : i32
    return %c0_i32, %c0_i32_0 : i32, i32
  }
  func.func @transform_2(%arg0: i32) -> (i32, i32) {
    %c0_i32 = arith.constant 0 : i32
    %c0_i32_0 = arith.constant 0 : i32
    %c0_i32_1 = arith.constant 0 : i32
    return %c0_i32, %c0_i32_0 : i32, i32
  }
  func.func @transform_3(%arg0: i32) -> (i32, i32) {
    %c0_i32 = arith.constant 0 : i32
    %c0_i32_0 = arith.constant 0 : i32
    %c0_i32_1 = arith.constant 0 : i32
    return %c0_i32, %c0_i32_0 : i32, i32
  }
  func.func @transform_4(%arg0: i32) -> (i32, i32) {
    %c0_i32 = arith.constant 0 : i32
    %c0_i32_0 = arith.constant 0 : i32
    %c0_i32_1 = arith.constant 0 : i32
    return %c0_i32, %c0_i32_0 : i32, i32
  }
  func.func @transform_5(%arg0: i32) -> (i32, i32) {
    %c0_i32 = arith.constant 0 : i32
    %c0_i32_0 = arith.constant 0 : i32
    return %arg0, %c0_i32 : i32, i32
  }
}

</mosaic_0001>

<llo_original>
// kernel: tpu_custom_call.1
$region0: #{tpu_custom_call.1}
  #allocation0 [shape = 'u32[]', space=smem, size = 0x4, offset = 0x4, fixed_abs, tag = 'smem constant byte address 0x4 - core index']
  #allocation1 [shape = 'u32[144,128]{1,0:T(1,128)}', space=vmem, size = 0x12000, scoped, tag = 'internal scratch']
  %s0 = inlined_call_operand.vmem [shape: f32[2,256], index: 0, kind: input, shape index: {}]
  %s1 = inlined_call_operand.hbm [shape: f32[256,512], index: 1, kind: input, shape index: {}]
  %s2 = inlined_call_operand.vmem [shape: f32[1,512], index: 2, kind: input, shape index: {}]
  %s3 = inlined_call_operand.vmem [shape: f32[512,16], index: 3, kind: input, shape index: {}]
  %s4 = inlined_call_operand.vmem [shape: f32[1,16], index: 4, kind: input, shape index: {}]
  %s5 = inlined_call_operand.hbm [shape: f32[2,16], index: 5, kind: output, shape index: {}]
  %s6 = sld [smem:[#allocation0]]
  $region34: #{tpu_custom_call.1} parent=0
    _
  %s8 = ssub.s32 1, %s6
  %s9 = scalar_select 0, %s8, %s6
  $region1: #{tpu_custom_call.1} parent=0
    #allocation2 [shape = 'u8[524288]{0}', space=vmem, size = 0x80000, scoped, tag = 'input window, operand 1, single buffered']
    #allocation3 [shape = 's32[1]{0}', space=sflag, size = 0x4, scoped, tag = 'scoped memory for tpu_custom_call.1']
    #allocation4 [shape = 's32[1]{0}', space=sflag, size = 0x4, scoped, tag = 'scoped memory for tpu_custom_call.1']
    #allocation5 [shape = 'u8[1024]{0}', space=vmem, size = 0x400, scoped, tag = 'output window, operand 0, single buffered']
    %10 = vsyncpa [#allocation3], 0
    %11 = vsyncpa [#allocation4], 0
    // Predicated region
    $region2: #{tpu_custom_call.1} parent=1 // pred_check
      _
    $region3: #{tpu_custom_call.1} parent=1 // pred_check_branch
      %13 = sbr.rel (0) target = $region5
    $region4: #{tpu_custom_call.1} parent=1 // pred_region
      _
    $region5: #{tpu_custom_call.1} parent=1 // pred_fallthru
      _
    // Predicated region
    $region6: #{tpu_custom_call.1} parent=1 // pred_check
      _
    $region7: #{tpu_custom_call.1} parent=1 // pred_check_branch
      %15 = sbr.rel (0) target = $region9
    $region8: #{tpu_custom_call.1} parent=1 // pred_region
      %s17 = ssub.s32 16384, 16384
      %18 = vsyncadd [#allocation3], %s17
      %s19 = sshll.u32 [#allocation2], 4
      %s20 = int_to_ptr.vmem [resolvable:$true] %s19
      %25 = dma.hbm_to_vmem [thread:$0]  %s1, 16384, %s20, [#allocation3], 512, 512, 32
    $region9: #{tpu_custom_call.1} parent=1 // pred_fallthru
      _
    // Predicated region
    $region10: #{tpu_custom_call.1} parent=1 // pred_check
      _
    $region11: #{tpu_custom_call.1} parent=1 // pred_check_branch
      %27 = sbr.rel (0) target = $region13
    $region12: #{tpu_custom_call.1} parent=1 // pred_region
      _
    $region13: #{tpu_custom_call.1} parent=1 // pred_fallthru
      _
    // Predicated region
    $region14: #{tpu_custom_call.1} parent=1 // pred_check
      _
    $region15: #{tpu_custom_call.1} parent=1 // pred_check_branch
      %29 = sbr.rel (0) target = $region17
    $region16: #{tpu_custom_call.1} parent=1 // pred_region
      _
    $region17: #{tpu_custom_call.1} parent=1 // pred_fallthru
      _
    // Predicated region
    $region18: #{tpu_custom_call.1} parent=1 // pred_check
      _
    $region19: #{tpu_custom_call.1} parent=1 // pred_check_branch
      %31 = sbr.rel (0) target = $region21
    $region20: #{tpu_custom_call.1} parent=1 // pred_region
      _
    $region21: #{tpu_custom_call.1} parent=1 // pred_fallthru
      _
    // Predicated region
    $region22: #{tpu_custom_call.1} parent=1 // pred_check
      _
    $region23: #{tpu_custom_call.1} parent=1 // pred_check_branch
      %33 = sbr.rel (0) target = $region25
    $region24: #{tpu_custom_call.1} parent=1 // pred_region
      %34 = dma.done [#allocation3], 16384
    $region25: #{tpu_custom_call.1} parent=1 // pred_fallthru
      _
    %v35 = vld [vmem:[%s0] sm:$0xf]
    %v36 = vld [vmem:[#allocation2] sm:$0xff]
    %v37 = vld [vmem:[#allocation2 + $0x8] sm:$0xff]
    %v38 = vld [vmem:[#allocation2 + $0x10] sm:$0xff]
    %v39 = vld [vmem:[#allocation2 + $0x18] sm:$0xff]
    %v40 = vld [vmem:[#allocation2 + $0x20] sm:$0xff]
    %v41 = vld [vmem:[#allocation2 + $0x28] sm:$0xff]
    %v42 = vld [vmem:[#allocation2 + $0x30] sm:$0xff]
    %v43 = vld [vmem:[#allocation2 + $0x38] sm:$0xff]
    %v44 = vld [vmem:[#allocation2 + $0x40] sm:$0xff]
    %v45 = vld [vmem:[#allocation2 + $0x48] sm:$0xff]
    %v46 = vld [vmem:[#allocation2 + $0x50] sm:$0xff]
    %v47 = vld [vmem:[#allocation2 + $0x58] sm:$0xff]
    %v48 = vld [vmem:[#allocation2 + $0x60] sm:$0xff]
    %v49 = vld [vmem:[#allocation2 + $0x68] sm:$0xff]
    %v50 = vld [vmem:[#allocation2 + $0x70] sm:$0xff]
    %v51 = vld [vmem:[#allocation2 + $0x78] sm:$0xff]
    %v52 = vld [vmem:[#allocation2 + $0x80] sm:$0xff]
    %v53 = vld [vmem:[#allocation2 + $0x88] sm:$0xff]
    %v54 = vld [vmem:[#allocation2 + $0x90] sm:$0xff]
    %v55 = vld [vmem:[#allocation2 + $0x98] sm:$0xff]
    %v56 = vld [vmem:[#allocation2 + $0xa0] sm:$0xff]
    %v57 = vld [vmem:[#allocation2 + $0xa8] sm:$0xff]
    %v58 = vld [vmem:[#allocation2 + $0xb0] sm:$0xff]
    %v59 = vld [vmem:[#allocation2 + $0xb8] sm:$0xff]
    %v60 = vld [vmem:[#allocation2 + $0xc0] sm:$0xff]
    %v61 = vld [vmem:[#allocation2 + $0xc8] sm:$0xff]
    %v62 = vld [vmem:[#allocation2 + $0xd0] sm:$0xff]
    %v63 = vld [vmem:[#allocation2 + $0xd8] sm:$0xff]
    %v64 = vld [vmem:[#allocation2 + $0xe0] sm:$0xff]
    %v65 = vld [vmem:[#allocation2 + $0xe8] sm:$0xff]
    %v66 = vld [vmem:[#allocation2 + $0xf0] sm:$0xff]
    %v67 = vld [vmem:[#allocation2 + $0xf8] sm:$0xff]
    %v68 = vld [vmem:[#allocation2 + $0x100] sm:$0xff]
    %v69 = vld [vmem:[#allocation2 + $0x108] sm:$0xff]
    %v70 = vld [vmem:[#allocation2 + $0x110] sm:$0xff]
    %v71 = vld [vmem:[#allocation2 + $0x118] sm:$0xff]
    %v72 = vld [vmem:[#allocation2 + $0x120] sm:$0xff]
    %v73 = vld [vmem:[#allocation2 + $0x128] sm:$0xff]
    %v74 = vld [vmem:[#allocation2 + $0x130] sm:$0xff]
    %v75 = vld [vmem:[#allocation2 + $0x138] sm:$0xff]
    %v76 = vld [vmem:[#allocation2 + $0x140] sm:$0xff]
    %v77 = vld [vmem:[#allocation2 + $0x148] sm:$0xff]
    %v78 = vld [vmem:[#allocation2 + $0x150] sm:$0xff]
    %v79 = vld [vmem:[#allocation2 + $0x158] sm:$0xff]
    %v80 = vld [vmem:[#allocation2 + $0x160] sm:$0xff]
    %v81 = vld [vmem:[#allocation2 + $0x168] sm:$0xff]
    %v82 = vld [vmem:[#allocation2 + $0x170] sm:$0xff]
    %v83 = vld [vmem:[#allocation2 + $0x178] sm:$0xff]
    %v84 = vld [vmem:[#allocation2 + $0x180] sm:$0xff]
    %v85 = vld [vmem:[#allocation2 + $0x188] sm:$0xff]
    %v86 = vld [vmem:[#allocation2 + $0x190] sm:$0xff]
    %v87 = vld [vmem:[#allocation2 + $0x198] sm:$0xff]
    %v88 = vld [vmem:[#allocation2 + $0x1a0] sm:$0xff]
    %v89 = vld [vmem:[#allocation2 + $0x1a8] sm:$0xff]
    %v90 = vld [vmem:[#allocation2 + $0x1b0] sm:$0xff]
    %v91 = vld [vmem:[#allocation2 + $0x1b8] sm:$0xff]
    %v92 = vld [vmem:[#allocation2 + $0x1c0] sm:$0xff]
    %v93 = vld [vmem:[#allocation2 + $0x1c8] sm:$0xff]
    %v94 = vld [vmem:[#allocation2 + $0x1d0] sm:$0xff]
    %v95 = vld [vmem:[#allocation2 + $0x1d8] sm:$0xff]
    %v96 = vld [vmem:[#allocation2 + $0x1e0] sm:$0xff]
    %v97 = vld [vmem:[#allocation2 + $0x1e8] sm:$0xff]
    %v98 = vld [vmem:[#allocation2 + $0x1f0] sm:$0xff]
    %v99 = vld [vmem:[#allocation2 + $0x1f8] sm:$0xff]
    %v100 = vld [vmem:[#allocation2 + $0x200] sm:$0xff]
    %v101 = vld [vmem:[#allocation2 + $0x208] sm:$0xff]
    %v102 = vld [vmem:[#allocation2 + $0x210] sm:$0xff]
    %v103 = vld [vmem:[#allocation2 + $0x218] sm:$0xff]
    %v104 = vld [vmem:[#allocation2 + $0x220] sm:$0xff]
    %v105 = vld [vmem:[#allocation2 + $0x228] sm:$0xff]
    %v106 = vld [vmem:[#allocation2 + $0x230] sm:$0xff]
    %v107 = vld [vmem:[#allocation2 + $0x238] sm:$0xff]
    %v108 = vld [vmem:[#allocation2 + $0x240] sm:$0xff]
    %v109 = vld [vmem:[#allocation2 + $0x248] sm:$0xff]
    %v110 = vld [vmem:[#allocation2 + $0x250] sm:$0xff]
    %v111 = vld [vmem:[#allocation2 + $0x258] sm:$0xff]
    %v112 = vld [vmem:[#allocation2 + $0x260] sm:$0xff]
    %v113 = vld [vmem:[#allocation2 + $0x268] sm:$0xff]
    %v114 = vld [vmem:[#allocation2 + $0x270] sm:$0xff]
    %v115 = vld [vmem:[#allocation2 + $0x278] sm:$0xff]
    %v116 = vld [vmem:[#allocation2 + $0x280] sm:$0xff]
    %v117 = vld [vmem:[#allocation2 + $0x288] sm:$0xff]
    %v118 = vld [vmem:[#allocation2 + $0x290] sm:$0xff]
    %v119 = vld [vmem:[#allocation2 + $0x298] sm:$0xff]
    %v120 = vld [vmem:[#allocation2 + $0x2a0] sm:$0xff]
    %v121 = vld [vmem:[#allocation2 + $0x2a8] sm:$0xff]
    %v122 = vld [vmem:[#allocation2 + $0x2b0] sm:$0xff]
    %v123 = vld [vmem:[#allocation2 + $0x2b8] sm:$0xff]
    %v124 = vld [vmem:[#allocation2 + $0x2c0] sm:$0xff]
    %v125 = vld [vmem:[#allocation2 + $0x2c8] sm:$0xff]
    %v126 = vld [vmem:[#allocation2 + $0x2d0] sm:$0xff]
    %v127 = vld [vmem:[#allocation2 + $0x2d8] sm:$0xff]
    %v128 = vld [vmem:[#allocation2 + $0x2e0] sm:$0xff]
    %v129 = vld [vmem:[#allocation2 + $0x2e8] sm:$0xff]
    %v130 = vld [vmem:[#allocation2 + $0x2f0] sm:$0xff]
    %v131 = vld [vmem:[#allocation2 + $0x2f8] sm:$0xff]
    %v132 = vld [vmem:[#allocation2 + $0x300] sm:$0xff]
    %v133 = vld [vmem:[#allocation2 + $0x308] sm:$0xff]
    %v134 = vld [vmem:[#allocation2 + $0x310] sm:$0xff]
    %v135 = vld [vmem:[#allocation2 + $0x318] sm:$0xff]
    %v136 = vld [vmem:[#allocation2 + $0x320] sm:$0xff]
    %v137 = vld [vmem:[#allocation2 + $0x328] sm:$0xff]
    %v138 = vld [vmem:[#allocation2 + $0x330] sm:$0xff]
    %v139 = vld [vmem:[#allocation2 + $0x338] sm:$0xff]
    %v140 = vld [vmem:[#allocation2 + $0x340] sm:$0xff]
    %v141 = vld [vmem:[#allocation2 + $0x348] sm:$0xff]
    %v142 = vld [vmem:[#allocation2 + $0x350] sm:$0xff]
    %v143 = vld [vmem:[#allocation2 + $0x358] sm:$0xff]
    %v144 = vld [vmem:[#allocation2 + $0x360] sm:$0xff]
    %v145 = vld [vmem:[#allocation2 + $0x368] sm:$0xff]
    %v146 = vld [vmem:[#allocation2 + $0x370] sm:$0xff]
    %v147 = vld [vmem:[#allocation2 + $0x378] sm:$0xff]
    %v148 = vld [vmem:[#allocation2 + $0x380] sm:$0xff]
    %v149 = vld [vmem:[#allocation2 + $0x388] sm:$0xff]
    %v150 = vld [vmem:[#allocation2 + $0x390] sm:$0xff]
    %v151 = vld [vmem:[#allocation2 + $0x398] sm:$0xff]
    %v152 = vld [vmem:[#allocation2 + $0x3a0] sm:$0xff]
    %v153 = vld [vmem:[#allocation2 + $0x3a8] sm:$0xff]
    %v154 = vld [vmem:[#allocation2 + $0x3b0] sm:$0xff]
    %v155 = vld [vmem:[#allocation2 + $0x3b8] sm:$0xff]
    %v156 = vld [vmem:[#allocation2 + $0x3c0] sm:$0xff]
    %v157 = vld [vmem:[#allocation2 + $0x3c8] sm:$0xff]
    %v158 = vld [vmem:[#allocation2 + $0x3d0] sm:$0xff]
    %v159 = vld [vmem:[#allocation2 + $0x3d8] sm:$0xff]
    %v160 = vld [vmem:[#allocation2 + $0x3e0] sm:$0xff]
    %v161 = vld [vmem:[#allocation2 + $0x3e8] sm:$0xff]
    %v162 = vld [vmem:[#allocation2 + $0x3f0] sm:$0xff]
    %v163 = vld [vmem:[#allocation2 + $0x3f8] sm:$0xff]
    %v164 = vld [vmem:[%s2] sm:$0xf]
    %v166 = vlaneseq
    %v167 = vshrl.u32 %v166, 7
    %v168 = vsub.s32 0, %v167
    %v169 = vrot.slane %v164, %v168
    %v170 = vlaneseq
    %v171 = vshrl.u32 %v170, 7
    %v172 = vsub.s32 1, %v171
    %v173 = vrot.slane %v164, %v172
    %v174 = vlaneseq
    %v175 = vshrl.u32 %v174, 7
    %v176 = vsub.s32 2, %v175
    %v177 = vrot.slane %v164, %v176
    %v178 = vlaneseq
    %v179 = vshrl.u32 %v178, 7
    %v180 = vsub.s32 3, %v179
    %v181 = vrot.slane %v164, %v180
    %v188 = vunpack.c.l.s4 1983009808
    %v189 = vunpack.c.0.s8 %v188
    %v190 = vlaneseq
    %v191 = vshrl.u32 %v190, 7
    %v192 = vsub.s32 %v189, %v191
    %v193 = vrot.slane %v35, %v192
    %v194 = vcombine.high %v193, %v193
    %197 = vmatprep.subr.mxu0 %v37
    %198 = vmatpush1.msra.mxu0 %v36
    %199 = vmatprep.subr.mxu0 %v41
    %200 = vmatpush1.msra.mxu0 %v40
    %201 = vmatprep.subr.mxu0 %v45
    %202 = vmatpush1.msra.mxu0 %v44
    %203 = vmatprep.subr.mxu0 %v49
    %204 = vmatpush1.msra.mxu0 %v48
    %205 = vmatprep.subr.mxu0 %v53
    %206 = vmatpush1.msra.mxu0 %v52
    %207 = vmatprep.subr.mxu0 %v57
    %208 = vmatpush1.msra.mxu0 %v56
    %209 = vmatprep.subr.mxu0 %v61
    %210 = vmatpush1.msra.mxu0 %v60
    %211 = vmatprep.subr.mxu0 %v65
    %212 = vmatpush1.msra.mxu0 %v64
    %213 = vmatprep.subr.mxu0 %v69
    %214 = vmatpush1.msra.mxu0 %v68
    %215 = vmatprep.subr.mxu0 %v73
    %216 = vmatpush1.msra.mxu0 %v72
    %217 = vmatprep.subr.mxu0 %v77
    %218 = vmatpush1.msra.mxu0 %v76
    %219 = vmatprep.subr.mxu0 %v81
    %220 = vmatpush1.msra.mxu0 %v80
    %221 = vmatprep.subr.mxu0 %v85
    %222 = vmatpush1.msra.mxu0 %v84
    %223 = vmatprep.subr.mxu0 %v89
    %224 = vmatpush1.msra.mxu0 %v88
    %225 = vmatprep.subr.mxu0 %v93
    %226 = vmatpush1.msra.mxu0 %v92
    %227 = vmatprep.subr.mxu0 %v97
    %228 = vmatpush1.msra.mxu0 %v96
    %229 = vmatprep.subr.mxu0 %v101
    %230 = vmatpush1.msra.mxu0 %v100
    %231 = vmatprep.subr.mxu0 %v105
    %232 = vmatpush1.msra.mxu0 %v104
    %233 = vmatprep.subr.mxu0 %v109
    %234 = vmatpush1.msra.mxu0 %v108
    %235 = vmatprep.subr.mxu0 %v113
    %236 = vmatpush1.msra.mxu0 %v112
    %237 = vmatprep.subr.mxu0 %v117
    %238 = vmatpush1.msra.mxu0 %v116
    %239 = vmatprep.subr.mxu0 %v121
    %240 = vmatpush1.msra.mxu0 %v120
    %241 = vmatprep.subr.mxu0 %v125
    %242 = vmatpush1.msra.mxu0 %v124
    %243 = vmatprep.subr.mxu0 %v129
    %244 = vmatpush1.msra.mxu0 %v128
    %245 = vmatprep.subr.mxu0 %v133
    %246 = vmatpush1.msra.mxu0 %v132
    %247 = vmatprep.subr.mxu0 %v137
    %248 = vmatpush1.msra.mxu0 %v136
    %249 = vmatprep.subr.mxu0 %v141
    %250 = vmatpush1.msra.mxu0 %v140
    %251 = vmatprep.subr.mxu0 %v145
    %252 = vmatpush1.msra.mxu0 %v144
    %253 = vmatprep.subr.mxu0 %v149
    %254 = vmatpush1.msra.mxu0 %v148
    %255 = vmatprep.subr.mxu0 %v153
    %256 = vmatpush1.msra.mxu0 %v152
    %257 = vmatprep.subr.mxu0 %v157
    %258 = vmatpush1.msra.mxu0 %v156
    %259 = vmatprep.subr.mxu0 %v161
    %260 = vmatpush1.msra.mxu0 %v160
    %261 = vmatprep.mubr.f32.mxu0 %v194
    %262 = vmatmul.mubr.f32.gmra.mrb[0].mxu0 %v193
    %v263 = vpop.f32.mrb[0].mxu0
    %v264 = vadd.f32 %v169, %v263
    %v265 = vpop.f32.mrb[0].mxu0
    %v266 = vadd.f32 %v173, %v265
    %267 = vdwg.mxu0
    %268 = vmatprep.subr.mxu0 %v39
    %269 = vmatpush1.msra.mxu0 %v38
    %270 = vmatprep.subr.mxu0 %v43
    %271 = vmatpush1.msra.mxu0 %v42
    %272 = vmatprep.subr.mxu0 %v47
    %273 = vmatpush1.msra.mxu0 %v46
    %274 = vmatprep.subr.mxu0 %v51
    %275 = vmatpush1.msra.mxu0 %v50
    %276 = vmatprep.subr.mxu0 %v55
    %277 = vmatpush1.msra.mxu0 %v54
    %278 = vmatprep.subr.mxu0 %v59
    %279 = vmatpush1.msra.mxu0 %v58
    %280 = vmatprep.subr.mxu0 %v63
    %281 = vmatpush1.msra.mxu0 %v62
    %282 = vmatprep.subr.mxu0 %v67
    %283 = vmatpush1.msra.mxu0 %v66
    %284 = vmatprep.subr.mxu0 %v71
    %285 = vmatpush1.msra.mxu0 %v70
    %286 = vmatprep.subr.mxu0 %v75
    %287 = vmatpush1.msra.mxu0 %v74
    %288 = vmatprep.subr.mxu0 %v79
    %289 = vmatpush1.msra.mxu0 %v78
    %290 = vmatprep.subr.mxu0 %v83
    %291 = vmatpush1.msra.mxu0 %v82
    %292 = vmatprep.subr.mxu0 %v87
    %293 = vmatpush1.msra.mxu0 %v86
    %294 = vmatprep.subr.mxu0 %v91
    %295 = vmatpush1.msra.mxu0 %v90
    %296 = vmatprep.subr.mxu0 %v95
    %297 = vmatpush1.msra.mxu0 %v94
    %298 = vmatprep.subr.mxu0 %v99
    %299 = vmatpush1.msra.mxu0 %v98
    %300 = vmatprep.subr.mxu0 %v103
    %301 = vmatpush1.msra.mxu0 %v102
    %302 = vmatprep.subr.mxu0 %v107
    %303 = vmatpush1.msra.mxu0 %v106
    %304 = vmatprep.subr.mxu0 %v111
    %305 = vmatpush1.msra.mxu0 %v110
    %306 = vmatprep.subr.mxu0 %v115
    %307 = vmatpush1.msra.mxu0 %v114
    %308 = vmatprep.subr.mxu0 %v119
    %309 = vmatpush1.msra.mxu0 %v118
    %310 = vmatprep.subr.mxu0 %v123
    %311 = vmatpush1.msra.mxu0 %v122
    %312 = vmatprep.subr.mxu0 %v127
    %313 = vmatpush1.msra.mxu0 %v126
    %314 = vmatprep.subr.mxu0 %v131
    %315 = vmatpush1.msra.mxu0 %v130
    %316 = vmatprep.subr.mxu0 %v135
    %317 = vmatpush1.msra.mxu0 %v134
    %318 = vmatprep.subr.mxu0 %v139
    %319 = vmatpush1.msra.mxu0 %v138
    %320 = vmatprep.subr.mxu0 %v143
    %321 = vmatpush1.msra.mxu0 %v142
    %322 = vmatprep.subr.mxu0 %v147
    %323 = vmatpush1.msra.mxu0 %v146
    %324 = vmatprep.subr.mxu0 %v151
    %325 = vmatpush1.msra.mxu0 %v150
    %326 = vmatprep.subr.mxu0 %v155
    %327 = vmatpush1.msra.mxu0 %v154
    %328 = vmatprep.subr.mxu0 %v159
    %329 = vmatpush1.msra.mxu0 %v158
    %330 = vmatprep.subr.mxu0 %v163
    %331 = vmatpush1.msra.mxu0 %v162
    %332 = vmatprep.mubr.f32.mxu0 %v194
    %333 = vmatmul.mubr.f32.gmra.mrb[0].mxu0 %v193
    %v334 = vpop.f32.mrb[0].mxu0
    %v335 = vadd.f32 %v177, %v334
    %v336 = vpop.f32.mrb[0].mxu0
    %v337 = vadd.f32 %v181, %v336
    %338 = vdwg.mxu0
    %v339 = vmax.f32 %v264, 0.0
    %v340 = vmax.f32 %v266, 0.0
    %v341 = vmax.f32 %v335, 0.0
    %v342 = vmax.f32 %v337, 0.0
    %v343 = vld [vmem:[%s3] sm:$0xff]
    %v344 = vld [vmem:[%s3 + $0x8] sm:$0xff]
    %v345 = vld [vmem:[%s3 + $0x10] sm:$0xff]
    %v346 = vld [vmem:[%s3 + $0x18] sm:$0xff]
    %v347 = vld [vmem:[%s3 + $0x20] sm:$0xff]
    %v348 = vld [vmem:[%s3 + $0x28] sm:$0xff]
    %v349 = vld [vmem:[%s3 + $0x30] sm:$0xff]
    %v350 = vld [vmem:[%s3 + $0x38] sm:$0xff]
    %v351 = vld [vmem:[%s3 + $0x40] sm:$0xff]
    %v352 = vld [vmem:[%s3 + $0x48] sm:$0xff]
    %v353 = vld [vmem:[%s3 + $0x50] sm:$0xff]
    %v354 = vld [vmem:[%s3 + $0x58] sm:$0xff]
    %v355 = vld [vmem:[%s3 + $0x60] sm:$0xff]
    %v356 = vld [vmem:[%s3 + $0x68] sm:$0xff]
    %v357 = vld [vmem:[%s3 + $0x70] sm:$0xff]
    %v358 = vld [vmem:[%s3 + $0x78] sm:$0xff]
    %v359 = vld [vmem:[%s3 + $0x80] sm:$0xff]
    %v360 = vld [vmem:[%s3 + $0x88] sm:$0xff]
    %v361 = vld [vmem:[%s3 + $0x90] sm:$0xff]
    %v362 = vld [vmem:[%s3 + $0x98] sm:$0xff]
    %v363 = vld [vmem:[%s3 + $0xa0] sm:$0xff]
    %v364 = vld [vmem:[%s3 + $0xa8] sm:$0xff]
    %v365 = vld [vmem:[%s3 + $0xb0] sm:$0xff]
    %v366 = vld [vmem:[%s3 + $0xb8] sm:$0xff]
    %v367 = vld [vmem:[%s3 + $0xc0] sm:$0xff]
    %v368 = vld [vmem:[%s3 + $0xc8] sm:$0xff]
    %v369 = vld [vmem:[%s3 + $0xd0] sm:$0xff]
    %v370 = vld [vmem:[%s3 + $0xd8] sm:$0xff]
    %v371 = vld [vmem:[%s3 + $0xe0] sm:$0xff]
    %v372 = vld [vmem:[%s3 + $0xe8] sm:$0xff]
    %v373 = vld [vmem:[%s3 + $0xf0] sm:$0xff]
    %v374 = vld [vmem:[%s3 + $0xf8] sm:$0xff]
    %v375 = vld [vmem:[%s3 + $0x100] sm:$0xff]
    %v376 = vld [vmem:[%s3 + $0x108] sm:$0xff]
    %v377 = vld [vmem:[%s3 + $0x110] sm:$0xff]
    %v378 = vld [vmem:[%s3 + $0x118] sm:$0xff]
    %v379 = vld [vmem:[%s3 + $0x120] sm:$0xff]
    %v380 = vld [vmem:[%s3 + $0x128] sm:$0xff]
    %v381 = vld [vmem:[%s3 + $0x130] sm:$0xff]
    %v382 = vld [vmem:[%s3 + $0x138] sm:$0xff]
    %v383 = vld [vmem:[%s3 + $0x140] sm:$0xff]
    %v384 = vld [vmem:[%s3 + $0x148] sm:$0xff]
    %v385 = vld [vmem:[%s3 + $0x150] sm:$0xff]
    %v386 = vld [vmem:[%s3 + $0x158] sm:$0xff]
    %v387 = vld [vmem:[%s3 + $0x160] sm:$0xff]
    %v388 = vld [vmem:[%s3 + $0x168] sm:$0xff]
    %v389 = vld [vmem:[%s3 + $0x170] sm:$0xff]
    %v390 = vld [vmem:[%s3 + $0x178] sm:$0xff]
    %v391 = vld [vmem:[%s3 + $0x180] sm:$0xff]
    %v392 = vld [vmem:[%s3 + $0x188] sm:$0xff]
    %v393 = vld [vmem:[%s3 + $0x190] sm:$0xff]
    %v394 = vld [vmem:[%s3 + $0x198] sm:$0xff]
    %v395 = vld [vmem:[%s3 + $0x1a0] sm:$0xff]
    %v396 = vld [vmem:[%s3 + $0x1a8] sm:$0xff]
    %v397 = vld [vmem:[%s3 + $0x1b0] sm:$0xff]
    %v398 = vld [vmem:[%s3 + $0x1b8] sm:$0xff]
    %v399 = vld [vmem:[%s3 + $0x1c0] sm:$0xff]
    %v400 = vld [vmem:[%s3 + $0x1c8] sm:$0xff]
    %v401 = vld [vmem:[%s3 + $0x1d0] sm:$0xff]
    %v402 = vld [vmem:[%s3 + $0x1d8] sm:$0xff]
    %v403 = vld [vmem:[%s3 + $0x1e0] sm:$0xff]
    %v404 = vld [vmem:[%s3 + $0x1e8] sm:$0xff]
    %v405 = vld [vmem:[%s3 + $0x1f0] sm:$0xff]
    %v406 = vld [vmem:[%s3 + $0x1f8] sm:$0xff]
    %v407 = vld [vmem:[%s4] sm:$0x1]
    %v409 = vlaneseq
    %v410 = vshrl.u32 %v409, 7
    %v411 = vsub.s32 0, %v410
    %v412 = vrot.slane %v407, %v411
    %414 = vmatprep.subr.mxu0 0.0
    %415 = vmatpush1.msra.mxu0 %v343
    %416 = vmatprep.subr.mxu0 0.0
    %417 = vmatpush1.msra.mxu0 %v344
    %418 = vmatprep.subr.mxu0 0.0
    %419 = vmatpush1.msra.mxu0 %v345
    %420 = vmatprep.subr.mxu0 0.0
    %421 = vmatpush1.msra.mxu0 %v346
    %422 = vmatprep.subr.mxu0 0.0
    %423 = vmatpush1.msra.mxu0 %v347
    %424 = vmatprep.subr.mxu0 0.0
    %425 = vmatpush1.msra.mxu0 %v348
    %426 = vmatprep.subr.mxu0 0.0
    %427 = vmatpush1.msra.mxu0 %v349
    %428 = vmatprep.subr.mxu0 0.0
    %429 = vmatpush1.msra.mxu0 %v350
    %430 = vmatprep.subr.mxu0 0.0
    %431 = vmatpush1.msra.mxu0 %v351
    %432 = vmatprep.subr.mxu0 0.0
    %433 = vmatpush1.msra.mxu0 %v352
    %434 = vmatprep.subr.mxu0 0.0
    %435 = vmatpush1.msra.mxu0 %v353
    %436 = vmatprep.subr.mxu0 0.0
    %437 = vmatpush1.msra.mxu0 %v354
    %438 = vmatprep.subr.mxu0 0.0
    %439 = vmatpush1.msra.mxu0 %v355
    %440 = vmatprep.subr.mxu0 0.0
    %441 = vmatpush1.msra.mxu0 %v356
    %442 = vmatprep.subr.mxu0 0.0
    %443 = vmatpush1.msra.mxu0 %v357
    %444 = vmatprep.subr.mxu0 0.0
    %445 = vmatpush1.msra.mxu0 %v358
    %446 = vmatprep.subr.mxu0 0.0
    %447 = vmatpush1.msra.mxu0 %v359
    %448 = vmatprep.subr.mxu0 0.0
    %449 = vmatpush1.msra.mxu0 %v360
    %450 = vmatprep.subr.mxu0 0.0
    %451 = vmatpush1.msra.mxu0 %v361
    %452 = vmatprep.subr.mxu0 0.0
    %453 = vmatpush1.msra.mxu0 %v362
    %454 = vmatprep.subr.mxu0 0.0
    %455 = vmatpush1.msra.mxu0 %v363
    %456 = vmatprep.subr.mxu0 0.0
    %457 = vmatpush1.msra.mxu0 %v364
    %458 = vmatprep.subr.mxu0 0.0
    %459 = vmatpush1.msra.mxu0 %v365
    %460 = vmatprep.subr.mxu0 0.0
    %461 = vmatpush1.msra.mxu0 %v366
    %462 = vmatprep.subr.mxu0 0.0
    %463 = vmatpush1.msra.mxu0 %v367
    %464 = vmatprep.subr.mxu0 0.0
    %465 = vmatpush1.msra.mxu0 %v368
    %466 = vmatprep.subr.mxu0 0.0
    %467 = vmatpush1.msra.mxu0 %v369
    %468 = vmatprep.subr.mxu0 0.0
    %469 = vmatpush1.msra.mxu0 %v370
    %470 = vmatprep.subr.mxu0 0.0
    %471 = vmatpush1.msra.mxu0 %v371
    %472 = vmatprep.subr.mxu0 0.0
    %473 = vmatpush1.msra.mxu0 %v372
    %474 = vmatprep.subr.mxu0 0.0
    %475 = vmatpush1.msra.mxu0 %v373
    %476 = vmatprep.subr.mxu0 0.0
    %477 = vmatpush1.msra.mxu0 %v374
    %478 = vmatprep.mubr.f32.mxu0 %v340
    %479 = vmatmul.mubr.f32.gmra.mrb[0].mxu0 %v339
    %v480 = vpop.f32.mrb[0].mxu0
    %v481 = vadd.f32 %v412, %v480
    %v482 = vpop.f32.mrb[0].mxu0
    %483 = vdwg.mxu0
    %484 = vmatprep.subr.mxu0 0.0
    %485 = vmatpush1.msra.mxu0 %v375
    %486 = vmatprep.subr.mxu0 0.0
    %487 = vmatpush1.msra.mxu0 %v376
    %488 = vmatprep.subr.mxu0 0.0
    %489 = vmatpush1.msra.mxu0 %v377
    %490 = vmatprep.subr.mxu0 0.0
    %491 = vmatpush1.msra.mxu0 %v378
    %492 = vmatprep.subr.mxu0 0.0
    %493 = vmatpush1.msra.mxu0 %v379
    %494 = vmatprep.subr.mxu0 0.0
    %495 = vmatpush1.msra.mxu0 %v380
    %496 = vmatprep.subr.mxu0 0.0
    %497 = vmatpush1.msra.mxu0 %v381
    %498 = vmatprep.subr.mxu0 0.0
    %499 = vmatpush1.msra.mxu0 %v382
    %500 = vmatprep.subr.mxu0 0.0
    %501 = vmatpush1.msra.mxu0 %v383
    %502 = vmatprep.subr.mxu0 0.0
    %503 = vmatpush1.msra.mxu0 %v384
    %504 = vmatprep.subr.mxu0 0.0
    %505 = vmatpush1.msra.mxu0 %v385
    %506 = vmatprep.subr.mxu0 0.0
    %507 = vmatpush1.msra.mxu0 %v386
    %508 = vmatprep.subr.mxu0 0.0
    %509 = vmatpush1.msra.mxu0 %v387
    %510 = vmatprep.subr.mxu0 0.0
    %511 = vmatpush1.msra.mxu0 %v388
    %512 = vmatprep.subr.mxu0 0.0
    %513 = vmatpush1.msra.mxu0 %v389
    %514 = vmatprep.subr.mxu0 0.0
    %515 = vmatpush1.msra.mxu0 %v390
    %516 = vmatprep.subr.mxu0 0.0
    %517 = vmatpush1.msra.mxu0 %v391
    %518 = vmatprep.subr.mxu0 0.0
    %519 = vmatpush1.msra.mxu0 %v392
    %520 = vmatprep.subr.mxu0 0.0
    %521 = vmatpush1.msra.mxu0 %v393
    %522 = vmatprep.subr.mxu0 0.0
    %523 = vmatpush1.msra.mxu0 %v394
    %524 = vmatprep.subr.mxu0 0.0
    %525 = vmatpush1.msra.mxu0 %v395
    %526 = vmatprep.subr.mxu0 0.0
    %527 = vmatpush1.msra.mxu0 %v396
    %528 = vmatprep.subr.mxu0 0.0
    %529 = vmatpush1.msra.mxu0 %v397
    %530 = vmatprep.subr.mxu0 0.0
    %531 = vmatpush1.msra.mxu0 %v398
    %532 = vmatprep.subr.mxu0 0.0
    %533 = vmatpush1.msra.mxu0 %v399
    %534 = vmatprep.subr.mxu0 0.0
    %535 = vmatpush1.msra.mxu0 %v400
    %536 = vmatprep.subr.mxu0 0.0
    %537 = vmatpush1.msra.mxu0 %v401
    %538 = vmatprep.subr.mxu0 0.0
    %539 = vmatpush1.msra.mxu0 %v402
    %540 = vmatprep.subr.mxu0 0.0
    %541 = vmatpush1.msra.mxu0 %v403
    %542 = vmatprep.subr.mxu0 0.0
    %543 = vmatpush1.msra.mxu0 %v404
    %544 = vmatprep.subr.mxu0 0.0
    %545 = vmatpush1.msra.mxu0 %v405
    %546 = vmatprep.subr.mxu0 0.0
    %547 = vmatpush1.msra.mxu0 %v406
    %548 = vmatprep.mubr.f32.mxu0 %v342
    %549 = vmatmul.mubr.f32.gmra.mrb[0].mxu0 %v341
    %v550 = vpop.f32.mrb[0].mxu0
    %v551 = vadd.f32 %v481, %v550
    %v552 = vpop.f32.mrb[0].mxu0
    %553 = vdwg.mxu0
    %vm554 = vcmask 123904
    %555 = vst.msk [vmem:[#allocation5] sm:$0x3] %vm554, %v551
    // Predicated region
    $region26: #{tpu_custom_call.1} parent=1 // pred_check
      _
    $region27: #{tpu_custom_call.1} parent=1 // pred_check_branch
      %557 = sbr.rel (0) target = $region29
    $region28: #{tpu_custom_call.1} parent=1 // pred_region
      %s559 = ssub.s32 32, 32
      %560 = vsyncadd [#allocation4], %s559
      %s562 = sshll.u32 [#allocation5], 4
      %s563 = int_to_ptr.vmem [resolvable:$true] %s562
      %565 = dma.vmem_to_hbm [thread:$0]  %s563, 32, %s5, [#allocation4]
    $region29: #{tpu_custom_call.1} parent=1 // pred_fallthru
      _
    // Predicated region
    $region30: #{tpu_custom_call.1} parent=1 // pred_check
      _
    $region31: #{tpu_custom_call.1} parent=1 // pred_check_branch
      %567 = sbr.rel (0) target = $region33
    $region32: #{tpu_custom_call.1} parent=1 // pred_region
      %568 = dma.done [#allocation4], 32
    $region33: #{tpu_custom_call.1} parent=1 // pred_fallthru
      _
    %569 = vsyncpa [#allocation3], 1
    %570 = vsyncpa [#allocation4], 1

</llo_original>
